<compile_context>
chip_gen: v5e
topology: v5e:2x2
jax: 0.10.0
libtpu: 0.0.40
codegen_flags: <defaults>
</compile_context>

<pallas_src>
import functools

import jax
import jax.numpy as jnp
from jax.experimental import pallas as pl
from jax.experimental.pallas import tpu as pltpu

IN_DIM = 100
IN_PAD = 128           # contracting dim padded to one full lane tile
HID_DIM = 16 * 16      # 256
OUT_DIM = 28 * 28      # 784  (6*128 + 16 -> masked tail store; fine, mem-bound)


def _round_up(n, m):
    return ((n + m - 1) // m) * m


def _eup_bf16_ok():
    """True on TPU generations with a bf16 VPU/EUP path (v6e and newer)."""
    try:
        kind = jax.devices()[0].device_kind.lower()
    except Exception:
        return False
    return not any(tag in kind for tag in ("v2", "v3", "v4", "v5"))


def _gen_kernel(x_ref, w1_ref, b1_ref, w2_ref, b2_ref, o_ref, *, tanh_bf16):
    # x_ref:  (TB, 128)  bf16      w1_ref: (128, 256) bf16   b1_ref: (1, 256) f32
    # w2_ref: (256, 784) bf16      b2_ref: (1, 784)   f32    o_ref:  (TB, 784) f32
    h = jnp.dot(x_ref[...], w1_ref[...],
                preferred_element_type=jnp.float32)              # MXU, f32 accum
    h = jnp.maximum(h + b1_ref[...], 0.0)                        # bias + ReLU (VPU, f32)
    o = jnp.dot(h.astype(jnp.bfloat16), w2_ref[...],
                preferred_element_type=jnp.float32)              # MXU, f32 accum
    o = o + b2_ref[...]                                          # bias (VPU, f32)
    if tanh_bf16:
        # v6e/v7x: bf16 EUP tanh (~2x transcendental throughput); cast back for store.
        o_ref[...] = jnp.tanh(o.astype(jnp.bfloat16)).astype(jnp.float32)
    else:
        # v5e and older: no bf16 EUP path — keep tanh in f32.
        o_ref[...] = jnp.tanh(o)


def prepare_params(w1, b1, w2, b2):
    """One-time parameter prep (do NOT call per forward):

    w1: (100, 256) -> zero-pad K to 128, cast bf16
    w2: (256, 784) -> cast bf16
    b1/b2 stay f32.
    """
    w1_p = jnp.pad(w1, ((0, IN_PAD - IN_DIM), (0, 0))).astype(jnp.bfloat16)
    w2_p = w2.astype(jnp.bfloat16)
    return w1_p, b1.astype(jnp.float32), w2_p, b2.astype(jnp.float32)


def mygan_g_forward(x, params, *, tb_max=1024):
    """x: (B, 100) f32, params = prepare_params(...) -> (B, 1, 28, 28) f32 (NCHW)."""
    w1_p, b1, w2_p, b2 = params
    B = x.shape[0]

    # Batch tiling: minimize padding (<= a few rows) and, when the batch is big
    # enough, guarantee >=2 grid steps so v7x megacore shards the batch axis.
    b8 = max(8, _round_up(B, 8))
    n_tiles = max(1, pl.cdiv(b8, tb_max))
    if b8 >= 256:
        n_tiles = max(n_tiles, 2)
    tb = _round_up(pl.cdiv(b8, n_tiles), 8)
    Bp = n_tiles * tb

    # Only per-call data prep: row-pad the latent to Bp, lane-pad K 100->128,
    # cast to bf16 (x is ~8x narrower than the output, so this pass is cheap).
    x_p = jnp.pad(x, ((0, Bp - B), (0, IN_PAD - IN_DIM))).astype(jnp.bfloat16)

    kernel = functools.partial(_gen_kernel, tanh_bf16=_eup_bf16_ok())

    out = pl.pallas_call(
        kernel,
        out_shape=jax.ShapeDtypeStruct((Bp, OUT_DIM), jnp.float32),
        grid_spec=pltpu.PrefetchScalarGridSpec(
            num_scalar_prefetch=0,
            grid=(n_tiles,),
            in_specs=[
                pl.BlockSpec((tb, IN_PAD), lambda i: (i, 0)),        # x tile (pipelined)
                pl.BlockSpec((IN_PAD, HID_DIM), lambda i: (0, 0)),   # w1 resident
                pl.BlockSpec((1, HID_DIM), lambda i: (0, 0)),        # b1 resident
                pl.BlockSpec((HID_DIM, OUT_DIM), lambda i: (0, 0)),  # w2 resident
                pl.BlockSpec((1, OUT_DIM), lambda i: (0, 0)),        # b2 resident
            ],
            out_specs=pl.BlockSpec((tb, OUT_DIM), lambda i: (i, 0)),  # 784-wide, no pad
        ),
        compiler_params=pltpu.CompilerParams(
            dimension_semantics=("parallel",)),
    )(x_p, w1_p, b1, w2_p, b2)

    # Drop batch padding only if any was added; (B, 784)->(B,1,28,28) is a free view.
    if Bp != B:
        out = out[:B]
    return out.reshape(B, 1, 28, 28)


def init_params(key):
    """Deterministic parameter init (shapes from the module's __init__)."""
    k1, k2, k3, k4 = jax.random.split(key, 4)
    lim1 = 1.0 / jnp.sqrt(IN_DIM)
    lim2 = 1.0 / jnp.sqrt(HID_DIM)
    w1 = jax.random.uniform(k1, (IN_DIM, HID_DIM), jnp.float32, -lim1, lim1)
    b1 = jax.random.uniform(k2, (1, HID_DIM), jnp.float32, -lim1, lim1)
    w2 = jax.random.uniform(k3, (HID_DIM, OUT_DIM), jnp.float32, -lim2, lim2)
    b2 = jax.random.uniform(k4, (1, OUT_DIM), jnp.float32, -lim2, lim2)
    return w1, b1, w2, b2


if __name__ == "__main__":
    key = jax.random.PRNGKey(0)
    k_in, k_param = jax.random.split(key)

    B = 8
    x = jax.random.normal(k_in, (B, IN_DIM), jnp.float32)   # latent vectors
    w1, b1, w2, b2 = init_params(k_param)

    # Hoisted one-time weight prep (pad + bf16 cast), outside the hot path.
    params = prepare_params(w1, b1, w2, b2)

    fwd = jax.jit(mygan_g_forward)
    out = jax.block_until_ready(fwd(x, params))

    # f32 reference. Kernel uses bf16 MXU operands (f32 accum) and bf16 tanh on
    # v6e/v7x, so allow a loose-but-meaningful tolerance on [-1, 1] outputs.
    ref = jnp.tanh(jnp.maximum(x @ w1 + b1, 0.0) @ w2 + b2).reshape(B, 1, 28, 28)
    assert out.shape == (B, 1, 28, 28)
    assert out.dtype == jnp.float32
    max_err = float(jnp.max(jnp.abs(out - ref)))
    mean_err = float(jnp.mean(jnp.abs(out - ref)))
    assert max_err < 2e-2, f"max abs error vs f32 reference too large: {max_err}"
    assert mean_err < 2e-3, f"mean abs error vs f32 reference too large: {mean_err}"

    print("KERNEL_OK")
</pallas_src>

<mosaic_0001>
module attributes {stable_mosaic.version = 11 : i64} {
  func.func @_gen_kernel(%arg0: i32, %arg1: memref<8x128xbf16, #tpu.memory_space<vmem>>, %arg2: memref<128x256xbf16, #tpu.memory_space<vmem>>, %arg3: memref<1x256xf32, #tpu.memory_space<vmem>>, %arg4: memref<256x784xbf16, #tpu.memory_space<vmem>>, %arg5: memref<1x784xf32, #tpu.memory_space<vmem>>, %arg6: memref<8x784xf32, #tpu.memory_space<vmem>>) attributes {dimension_semantics = [#tpu.dimension_semantics<parallel>], iteration_bounds = array<i64: 1>, scalar_prefetch = 0 : i64, scratch_operands = 0 : i64, tpu.core_type = #tpu.core_type<tc>, window_params = [{transform_indices = @transform_0, window_bounds = array<i64: 8, 128>}, {pipeline_mode = #tpu.pipeline_mode<synchronous>, transform_indices = @transform_1, window_bounds = array<i64: 128, 256>}, {pipeline_mode = #tpu.pipeline_mode<synchronous>, transform_indices = @transform_2, window_bounds = array<i64: 1, 256>}, {pipeline_mode = #tpu.pipeline_mode<synchronous>, transform_indices = @transform_3, window_bounds = array<i64: 256, 784>}, {pipeline_mode = #tpu.pipeline_mode<synchronous>, transform_indices = @transform_4, window_bounds = array<i64: 1, 784>}, {transform_indices = @transform_5, window_bounds = array<i64: 8, 784>}]} {
    %c0 = arith.constant 0 : index
    %c0_0 = arith.constant 0 : index
    %0 = vector.load %arg1[%c0, %c0_0] : memref<8x128xbf16, #tpu.memory_space<vmem>>, vector<8x128xbf16>
    %c0_1 = arith.constant 0 : index
    %c0_2 = arith.constant 0 : index
    %1 = vector.load %arg2[%c0_1, %c0_2] : memref<128x256xbf16, #tpu.memory_space<vmem>>, vector<128x256xbf16>
    %cst = arith.constant dense<0.000000e+00> : vector<8x256xf32>
    %2 = tpu.matmul %0, %1, %cst {dimension_numbers = #tpu.dot_dimension_numbers<[1], [0], [0], [1], [0, 0, 1, 1], [], []>} : vector<8x128xbf16>, vector<128x256xbf16>, vector<8x256xf32> -> vector<8x256xf32>
    %c0_3 = arith.constant 0 : index
    %c0_4 = arith.constant 0 : index
    %3 = vector.load %arg3[%c0_3, %c0_4] : memref<1x256xf32, #tpu.memory_space<vmem>>, vector<1x256xf32>
    %4 = vector.broadcast %3 : vector<1x256xf32> to vector<8x256xf32>
    %5 = arith.addf %2, %4 : vector<8x256xf32>
    %cst_5 = arith.constant 0.000000e+00 : f32
    %6 = vector.broadcast %cst_5 : f32 to vector<8x256xf32>
    %7 = arith.maximumf %5, %6 : vector<8x256xf32>
    %8 = arith.truncf %7 : vector<8x256xf32> to vector<8x256xbf16>
    %c0_6 = arith.constant 0 : index
    %c0_7 = arith.constant 0 : index
    %9 = vector.load %arg4[%c0_6, %c0_7] : memref<256x784xbf16, #tpu.memory_space<vmem>>, vector<256x784xbf16>
    %cst_8 = arith.constant dense<0.000000e+00> : vector<8x784xf32>
    %10 = tpu.matmul %8, %9, %cst_8 {dimension_numbers = #tpu.dot_dimension_numbers<[1], [0], [0], [1], [0, 0, 1, 1], [], []>} : vector<8x256xbf16>, vector<256x784xbf16>, vector<8x784xf32> -> vector<8x784xf32>
    %c0_9 = arith.constant 0 : index
    %c0_10 = arith.constant 0 : index
    %11 = vector.load %arg5[%c0_9, %c0_10] : memref<1x784xf32, #tpu.memory_space<vmem>>, vector<1x784xf32>
    %12 = vector.broadcast %11 : vector<1x784xf32> to vector<8x784xf32>
    %13 = arith.addf %10, %12 : vector<8x784xf32>
    %14 = arith.truncf %13 : vector<8x784xf32> to vector<8x784xbf16>
    %15 = math.tanh %14 : vector<8x784xbf16>
    %16 = arith.extf %15 : vector<8x784xbf16> to vector<8x784xf32>
    %c0_11 = arith.constant 0 : index
    %c0_12 = arith.constant 0 : index
    %17 = vector.load %arg6[%c0_11, %c0_12] : memref<8x784xf32, #tpu.memory_space<vmem>>, vector<8x784xf32>
    tpu.vector_store %arg6[%c0_11, %c0_12], %16 {strides = array<i32>} : memref<8x784xf32, #tpu.memory_space<vmem>>, vector<8x784xf32>,
    return
  }
  func.func @transform_0(%arg0: i32) -> (i32, i32) {
    %c0_i32 = arith.constant 0 : i32
    %c0_i32_0 = arith.constant 0 : i32
    return %arg0, %c0_i32 : i32, i32
  }
  func.func @transform_1(%arg0: i32) -> (i32, i32) {
    %c0_i32 = arith.constant 0 : i32
    %c0_i32_0 = arith.constant 0 : i32
    %c0_i32_1 = arith.constant 0 : i32
    return %c0_i32, %c0_i32_0 : i32, i32
  }
  func.func @transform_2(%arg0: i32) -> (i32, i32) {
    %c0_i32 = arith.constant 0 : i32
    %c0_i32_0 = arith.constant 0 : i32
    %c0_i32_1 = arith.constant 0 : i32
    return %c0_i32, %c0_i32_0 : i32, i32
  }
  func.func @transform_3(%arg0: i32) -> (i32, i32) {
    %c0_i32 = arith.constant 0 : i32
    %c0_i32_0 = arith.constant 0 : i32
    %c0_i32_1 = arith.constant 0 : i32
    return %c0_i32, %c0_i32_0 : i32, i32
  }
  func.func @transform_4(%arg0: i32) -> (i32, i32) {
    %c0_i32 = arith.constant 0 : i32
    %c0_i32_0 = arith.constant 0 : i32
    %c0_i32_1 = arith.constant 0 : i32
    return %c0_i32, %c0_i32_0 : i32, i32
  }
  func.func @transform_5(%arg0: i32) -> (i32, i32) {
    %c0_i32 = arith.constant 0 : i32
    %c0_i32_0 = arith.constant 0 : i32
    return %arg0, %c0_i32 : i32, i32
  }
}

</mosaic_0001>

<llo_original>
// kernel: mygan_g_forward.1
$region0: #{mygan_g_forward.1}
  #allocation0 [shape = 'u32[]', space=smem, size = 0x4, offset = 0x4, fixed_abs, tag = 'smem constant byte address 0x4 - core index']
  #allocation1 [shape = 'u32[72,128]{1,0:T(1,128)}', space=vmem, size = 0x9000, scoped, tag = 'internal scratch']
  %s0 = inlined_call_operand.vmem [shape: bf16[8,128], index: 0, kind: input, shape index: {}]
  %s1 = inlined_call_operand.vmem [shape: bf16[128,256], index: 1, kind: input, shape index: {}]
  %s2 = inlined_call_operand.vmem [shape: f32[1,256], index: 2, kind: input, shape index: {}]
  %s3 = inlined_call_operand.vmem [shape: bf16[256,784], index: 3, kind: input, shape index: {}]
  %s4 = inlined_call_operand.vmem [shape: f32[1,784], index: 4, kind: input, shape index: {}]
  %s5 = inlined_call_operand.vmem [shape: f32[8,784], index: 5, kind: output, shape index: {}]
  %s6 = sld [smem:[#allocation0]]
  $region30: #{mygan_g_forward.1} parent=0
    _
  %s8 = ssub.s32 1, %s6
  %s9 = scalar_select 0, %s8, %s6
  // Predicated region
  $region2: #{mygan_g_forward.1} parent=0 // pred_check
    _
  $region3: #{mygan_g_forward.1} parent=0 // pred_check_branch
    %11 = sbr.rel (0) target = $region5
  $region4: #{mygan_g_forward.1} parent=0 // pred_region
    _
  $region5: #{mygan_g_forward.1} parent=0 // pred_fallthru
    _
  // Predicated region
  $region6: #{mygan_g_forward.1} parent=0 // pred_check
    _
  $region7: #{mygan_g_forward.1} parent=0 // pred_check_branch
    %13 = sbr.rel (0) target = $region9
  $region8: #{mygan_g_forward.1} parent=0 // pred_region
    _
  $region9: #{mygan_g_forward.1} parent=0 // pred_fallthru
    _
  // Predicated region
  $region10: #{mygan_g_forward.1} parent=0 // pred_check
    _
  $region11: #{mygan_g_forward.1} parent=0 // pred_check_branch
    %15 = sbr.rel (0) target = $region13
  $region12: #{mygan_g_forward.1} parent=0 // pred_region
    _
  $region13: #{mygan_g_forward.1} parent=0 // pred_fallthru
    _
  // Predicated region
  $region14: #{mygan_g_forward.1} parent=0 // pred_check
    _
  $region15: #{mygan_g_forward.1} parent=0 // pred_check_branch
    %17 = sbr.rel (0) target = $region17
  $region16: #{mygan_g_forward.1} parent=0 // pred_region
    _
  $region17: #{mygan_g_forward.1} parent=0 // pred_fallthru
    _
  // Predicated region
  $region18: #{mygan_g_forward.1} parent=0 // pred_check
    _
  $region19: #{mygan_g_forward.1} parent=0 // pred_check_branch
    %19 = sbr.rel (0) target = $region21
  $region20: #{mygan_g_forward.1} parent=0 // pred_region
    _
  $region21: #{mygan_g_forward.1} parent=0 // pred_fallthru
    _
  %v20 = vld [vmem:[%s0] sm:$0xf]
  %v21 = vld [vmem:[%s1] sm:$0xff]
  %v22 = vld [vmem:[%s1 + $0x8] sm:$0xff]
  %v23 = vld [vmem:[%s1 + $0x10] sm:$0xff]
  %v24 = vld [vmem:[%s1 + $0x18] sm:$0xff]
  %v25 = vld [vmem:[%s1 + $0x20] sm:$0xff]
  %v26 = vld [vmem:[%s1 + $0x28] sm:$0xff]
  %v27 = vld [vmem:[%s1 + $0x30] sm:$0xff]
  %v28 = vld [vmem:[%s1 + $0x38] sm:$0xff]
  %v29 = vld [vmem:[%s1 + $0x40] sm:$0xff]
  %v30 = vld [vmem:[%s1 + $0x48] sm:$0xff]
  %v31 = vld [vmem:[%s1 + $0x50] sm:$0xff]
  %v32 = vld [vmem:[%s1 + $0x58] sm:$0xff]
  %v33 = vld [vmem:[%s1 + $0x60] sm:$0xff]
  %v34 = vld [vmem:[%s1 + $0x68] sm:$0xff]
  %v35 = vld [vmem:[%s1 + $0x70] sm:$0xff]
  %v36 = vld [vmem:[%s1 + $0x78] sm:$0xff]
  %v37 = vld [vmem:[%s2] sm:$0x3]
  %v39 = vperm.slane %v37, 0
  %v40 = vperm.slane %v37, 1
  %v59 = vunpack.c.l.b16 %v21
  %v60 = vunpack.c.h.b16 %v21
  %v61 = vunpack.c.l.b16 %v22
  %v62 = vunpack.c.h.b16 %v22
  %v63 = vunpack.c.l.b16 %v23
  %v64 = vunpack.c.h.b16 %v23
  %v65 = vunpack.c.l.b16 %v24
  %v66 = vunpack.c.h.b16 %v24
  %v67 = vunpack.c.l.b16 %v25
  %v68 = vunpack.c.h.b16 %v25
  %v69 = vunpack.c.l.b16 %v26
  %v70 = vunpack.c.h.b16 %v26
  %v71 = vunpack.c.l.b16 %v27
  %v72 = vunpack.c.h.b16 %v27
  %v73 = vunpack.c.l.b16 %v28
  %v74 = vunpack.c.h.b16 %v28
  %v75 = vunpack.c.l.b16 %v29
  %v76 = vunpack.c.h.b16 %v29
  %v77 = vunpack.c.l.b16 %v30
  %v78 = vunpack.c.h.b16 %v30
  %v79 = vunpack.c.l.b16 %v31
  %v80 = vunpack.c.h.b16 %v31
  %v81 = vunpack.c.l.b16 %v32
  %v82 = vunpack.c.h.b16 %v32
  %v83 = vunpack.c.l.b16 %v33
  %v84 = vunpack.c.h.b16 %v33
  %v85 = vunpack.c.l.b16 %v34
  %v86 = vunpack.c.h.b16 %v34
  %v87 = vunpack.c.l.b16 %v35
  %v88 = vunpack.c.h.b16 %v35
  %v89 = vunpack.c.l.b16 %v36
  %v90 = vunpack.c.h.b16 %v36
  %v91 = vpack.c.b16 %v61, %v59
  %v92 = vpack.c.b16 %v62, %v60
  %v93 = vpack.c.b16 %v65, %v63
  %v94 = vpack.c.b16 %v66, %v64
  %v95 = vpack.c.b16 %v69, %v67
  %v96 = vpack.c.b16 %v70, %v68
  %v97 = vpack.c.b16 %v73, %v71
  %v98 = vpack.c.b16 %v74, %v72
  %v99 = vpack.c.b16 %v77, %v75
  %v100 = vpack.c.b16 %v78, %v76
  %v101 = vpack.c.b16 %v81, %v79
  %v102 = vpack.c.b16 %v82, %v80
  %v103 = vpack.c.b16 %v85, %v83
  %v104 = vpack.c.b16 %v86, %v84
  %v105 = vpack.c.b16 %v89, %v87
  %v106 = vpack.c.b16 %v90, %v88
  %123 = vmatpush.bf16.msra.mxu0 %v105
  %124 = vmatpush.bf16.msra.mxu0 %v103
  %125 = vmatpush.bf16.msra.mxu0 %v101
  %126 = vmatpush.bf16.msra.mxu0 %v99
  %127 = vmatpush.bf16.msra.mxu0 %v97
  %128 = vmatpush.bf16.msra.mxu0 %v95
  %129 = vmatpush.bf16.msra.mxu0 %v93
  %130 = vmatpush.bf16.msra.mxu0 %v91
  %131 = vmatmul.bf16.gmra.mxu0 %v20
  %v132 = vpop.f32.mrf.mxu0
  %v133 = vadd.f32 %v39, %v132
  %v134 = vpop.f32.mrf.mxu0
  %135 = vdwg.mxu0
  %136 = vmatpush.bf16.msra.mxu0 %v106
  %137 = vmatpush.bf16.msra.mxu0 %v104
  %138 = vmatpush.bf16.msra.mxu0 %v102
  %139 = vmatpush.bf16.msra.mxu0 %v100
  %140 = vmatpush.bf16.msra.mxu0 %v98
  %141 = vmatpush.bf16.msra.mxu0 %v96
  %142 = vmatpush.bf16.msra.mxu0 %v94
  %143 = vmatpush.bf16.msra.mxu0 %v92
  %144 = vmatmul.bf16.gmra.mxu0 %v20
  %v145 = vpop.f32.mrf.mxu0
  %v146 = vadd.f32 %v40, %v145
  %v147 = vpop.f32.mrf.mxu0
  %148 = vdwg.mxu0
  %v149 = vmax.f32 %v133, 0.0
  %v150 = vmax.f32 %v146, 0.0
  %v151 = vpack.c.bf16 %v149, %v149
  %v152 = vpack.c.bf16 %v150, %v150
  %v153 = vld [vmem:[%s3] sm:$0xff]
  %v154 = vld [vmem:[%s3 + $0x8] sm:$0xff]
  %v155 = vld [vmem:[%s3 + $0x10] sm:$0xff]
  %v156 = vld [vmem:[%s3 + $0x18] sm:$0xf]
  %v157 = vld [vmem:[%s3 + $0x1c] sm:$0xff]
  %v158 = vld [vmem:[%s3 + $0x24] sm:$0xff]
  %v159 = vld [vmem:[%s3 + $0x2c] sm:$0xff]
  %v160 = vld [vmem:[%s3 + $0x34] sm:$0xf]
  %v161 = vld [vmem:[%s3 + $0x38] sm:$0xff]
  %v162 = vld [vmem:[%s3 + $0x40] sm:$0xff]
  %v163 = vld [vmem:[%s3 + $0x48] sm:$0xff]
  %v164 = vld [vmem:[%s3 + $0x50] sm:$0xf]
  %v165 = vld [vmem:[%s3 + $0x54] sm:$0xff]
  %v166 = vld [vmem:[%s3 + $0x5c] sm:$0xff]
  %v167 = vld [vmem:[%s3 + $0x64] sm:$0xff]
  %v168 = vld [vmem:[%s3 + $0x6c] sm:$0xf]
  %v169 = vld [vmem:[%s3 + $0x70] sm:$0xff]
  %v170 = vld [vmem:[%s3 + $0x78] sm:$0xff]
  %v171 = vld [vmem:[%s3 + $0x80] sm:$0xff]
  %v172 = vld [vmem:[%s3 + $0x88] sm:$0xf]
  %v173 = vld [vmem:[%s3 + $0x8c] sm:$0xff]
  %v174 = vld [vmem:[%s3 + $0x94] sm:$0xff]
  %v175 = vld [vmem:[%s3 + $0x9c] sm:$0xff]
  %v176 = vld [vmem:[%s3 + $0xa4] sm:$0xf]
  %v177 = vld [vmem:[%s3 + $0xa8] sm:$0xff]
  %v178 = vld [vmem:[%s3 + $0xb0] sm:$0xff]
  %v179 = vld [vmem:[%s3 + $0xb8] sm:$0xff]
  %v180 = vld [vmem:[%s3 + $0xc0] sm:$0xf]
  %v181 = vld [vmem:[%s3 + $0xc4] sm:$0xff]
  %v182 = vld [vmem:[%s3 + $0xcc] sm:$0xff]
  %v183 = vld [vmem:[%s3 + $0xd4] sm:$0xff]
  %v184 = vld [vmem:[%s3 + $0xdc] sm:$0xf]
  %v185 = vld [vmem:[%s3 + $0xe0] sm:$0xff]
  %v186 = vld [vmem:[%s3 + $0xe8] sm:$0xff]
  %v187 = vld [vmem:[%s3 + $0xf0] sm:$0xff]
  %v188 = vld [vmem:[%s3 + $0xf8] sm:$0xf]
  %v189 = vld [vmem:[%s3 + $0xfc] sm:$0xff]
  %v190 = vld [vmem:[%s3 + $0x104] sm:$0xff]
  %v191 = vld [vmem:[%s3 + $0x10c] sm:$0xff]
  %v192 = vld [vmem:[%s3 + $0x114] sm:$0xf]
  %v193 = vld [vmem:[%s3 + $0x118] sm:$0xff]
  %v194 = vld [vmem:[%s3 + $0x120] sm:$0xff]
  %v195 = vld [vmem:[%s3 + $0x128] sm:$0xff]
  %v196 = vld [vmem:[%s3 + $0x130] sm:$0xf]
  %v197 = vld [vmem:[%s3 + $0x134] sm:$0xff]
  %v198 = vld [vmem:[%s3 + $0x13c] sm:$0xff]
  %v199 = vld [vmem:[%s3 + $0x144] sm:$0xff]
  %v200 = vld [vmem:[%s3 + $0x14c] sm:$0xf]
  %v201 = vld [vmem:[%s3 + $0x150] sm:$0xff]
  %v202 = vld [vmem:[%s3 + $0x158] sm:$0xff]
  %v203 = vld [vmem:[%s3 + $0x160] sm:$0xff]
  %v204 = vld [vmem:[%s3 + $0x168] sm:$0xf]
  %v205 = vld [vmem:[%s3 + $0x16c] sm:$0xff]
  %v206 = vld [vmem:[%s3 + $0x174] sm:$0xff]
  %v207 = vld [vmem:[%s3 + $0x17c] sm:$0xff]
  %v208 = vld [vmem:[%s3 + $0x184] sm:$0xf]
  %v209 = vld [vmem:[%s3 + $0x188] sm:$0xff]
  %v210 = vld [vmem:[%s3 + $0x190] sm:$0xff]
  %v211 = vld [vmem:[%s3 + $0x198] sm:$0xff]
  %v212 = vld [vmem:[%s3 + $0x1a0] sm:$0xf]
  %v213 = vld [vmem:[%s3 + $0x1a4] sm:$0xff]
  %v214 = vld [vmem:[%s3 + $0x1ac] sm:$0xff]
  %v215 = vld [vmem:[%s3 + $0x1b4] sm:$0xff]
  %v216 = vld [vmem:[%s3 + $0x1bc] sm:$0xf]
  %v217 = vld [vmem:[%s3 + $0x1c0] sm:$0xff]
  %v218 = vld [vmem:[%s3 + $0x1c8] sm:$0xff]
  %v219 = vld [vmem:[%s3 + $0x1d0] sm:$0xff]
  %v220 = vld [vmem:[%s3 + $0x1d8] sm:$0xf]
  %v221 = vld [vmem:[%s3 + $0x1dc] sm:$0xff]
  %v222 = vld [vmem:[%s3 + $0x1e4] sm:$0xff]
  %v223 = vld [vmem:[%s3 + $0x1ec] sm:$0xff]
  %v224 = vld [vmem:[%s3 + $0x1f4] sm:$0xf]
  %v225 = vld [vmem:[%s3 + $0x1f8] sm:$0xff]
  %v226 = vld [vmem:[%s3 + $0x200] sm:$0xff]
  %v227 = vld [vmem:[%s3 + $0x208] sm:$0xff]
  %v228 = vld [vmem:[%s3 + $0x210] sm:$0xf]
  %v229 = vld [vmem:[%s3 + $0x214] sm:$0xff]
  %v230 = vld [vmem:[%s3 + $0x21c] sm:$0xff]
  %v231 = vld [vmem:[%s3 + $0x224] sm:$0xff]
  %v232 = vld [vmem:[%s3 + $0x22c] sm:$0xf]
  %v233 = vld [vmem:[%s3 + $0x230] sm:$0xff]
  %v234 = vld [vmem:[%s3 + $0x238] sm:$0xff]
  %v235 = vld [vmem:[%s3 + $0x240] sm:$0xff]
  %v236 = vld [vmem:[%s3 + $0x248] sm:$0xf]
  %v237 = vld [vmem:[%s3 + $0x24c] sm:$0xff]
  %v238 = vld [vmem:[%s3 + $0x254] sm:$0xff]
  %v239 = vld [vmem:[%s3 + $0x25c] sm:$0xff]
  %v240 = vld [vmem:[%s3 + $0x264] sm:$0xf]
  %v241 = vld [vmem:[%s3 + $0x268] sm:$0xff]
  %v242 = vld [vmem:[%s3 + $0x270] sm:$0xff]
  %v243 = vld [vmem:[%s3 + $0x278] sm:$0xff]
  %v244 = vld [vmem:[%s3 + $0x280] sm:$0xf]
  %v245 = vld [vmem:[%s3 + $0x284] sm:$0xff]
  %v246 = vld [vmem:[%s3 + $0x28c] sm:$0xff]
  %v247 = vld [vmem:[%s3 + $0x294] sm:$0xff]
  %v248 = vld [vmem:[%s3 + $0x29c] sm:$0xf]
  %v249 = vld [vmem:[%s3 + $0x2a0] sm:$0xff]
  %v250 = vld [vmem:[%s3 + $0x2a8] sm:$0xff]
  %v251 = vld [vmem:[%s3 + $0x2b0] sm:$0xff]
  %v252 = vld [vmem:[%s3 + $0x2b8] sm:$0xf]
  %v253 = vld [vmem:[%s3 + $0x2bc] sm:$0xff]
  %v254 = vld [vmem:[%s3 + $0x2c4] sm:$0xff]
  %v255 = vld [vmem:[%s3 + $0x2cc] sm:$0xff]
  %v256 = vld [vmem:[%s3 + $0x2d4] sm:$0xf]
  %v257 = vld [vmem:[%s3 + $0x2d8] sm:$0xff]
  %v258 = vld [vmem:[%s3 + $0x2e0] sm:$0xff]
  %v259 = vld [vmem:[%s3 + $0x2e8] sm:$0xff]
  %v260 = vld [vmem:[%s3 + $0x2f0] sm:$0xf]
  %v261 = vld [vmem:[%s3 + $0x2f4] sm:$0xff]
  %v262 = vld [vmem:[%s3 + $0x2fc] sm:$0xff]
  %v263 = vld [vmem:[%s3 + $0x304] sm:$0xff]
  %v264 = vld [vmem:[%s3 + $0x30c] sm:$0xf]
  %v265 = vld [vmem:[%s3 + $0x310] sm:$0xff]
  %v266 = vld [vmem:[%s3 + $0x318] sm:$0xff]
  %v267 = vld [vmem:[%s3 + $0x320] sm:$0xff]
  %v268 = vld [vmem:[%s3 + $0x328] sm:$0xf]
  %v269 = vld [vmem:[%s3 + $0x32c] sm:$0xff]
  %v270 = vld [vmem:[%s3 + $0x334] sm:$0xff]
  %v271 = vld [vmem:[%s3 + $0x33c] sm:$0xff]
  %v272 = vld [vmem:[%s3 + $0x344] sm:$0xf]
  %v273 = vld [vmem:[%s3 + $0x348] sm:$0xff]
  %v274 = vld [vmem:[%s3 + $0x350] sm:$0xff]
  %v275 = vld [vmem:[%s3 + $0x358] sm:$0xff]
  %v276 = vld [vmem:[%s3 + $0x360] sm:$0xf]
  %v277 = vld [vmem:[%s3 + $0x364] sm:$0xff]
  %v278 = vld [vmem:[%s3 + $0x36c] sm:$0xff]
  %v279 = vld [vmem:[%s3 + $0x374] sm:$0xff]
  %v280 = vld [vmem:[%s3 + $0x37c] sm:$0xf]
  %v281 = vld [vmem:[%s4] sm:$0x7f]
  %v283 = vperm.slane %v281, 0
  %v284 = vperm.slane %v281, 1
  %v285 = vperm.slane %v281, 2
  %v286 = vperm.slane %v281, 3
  %v287 = vperm.slane %v281, 4
  %v288 = vperm.slane %v281, 5
  %v289 = vperm.slane %v281, 6
  %v425 = vunpack.c.l.b16 %v153
  %v426 = vunpack.c.h.b16 %v153
  %v427 = vunpack.c.l.b16 %v154
  %v428 = vunpack.c.h.b16 %v154
  %v429 = vunpack.c.l.b16 %v155
  %v430 = vunpack.c.h.b16 %v155
  %v431 = vunpack.c.l.b16 %v156
  %v432 = vunpack.c.l.b16 %v157
  %v433 = vunpack.c.h.b16 %v157
  %v434 = vunpack.c.l.b16 %v158
  %v435 = vunpack.c.h.b16 %v158
  %v436 = vunpack.c.l.b16 %v159
  %v437 = vunpack.c.h.b16 %v159
  %v438 = vunpack.c.l.b16 %v160
  %v439 = vunpack.c.l.b16 %v161
  %v440 = vunpack.c.h.b16 %v161
  %v441 = vunpack.c.l.b16 %v162
  %v442 = vunpack.c.h.b16 %v162
  %v443 = vunpack.c.l.b16 %v163
  %v444 = vunpack.c.h.b16 %v163
  %v445 = vunpack.c.l.b16 %v164
  %v446 = vunpack.c.l.b16 %v165
  %v447 = vunpack.c.h.b16 %v165
  %v448 = vunpack.c.l.b16 %v166
  %v449 = vunpack.c.h.b16 %v166
  %v450 = vunpack.c.l.b16 %v167
  %v451 = vunpack.c.h.b16 %v167
  %v452 = vunpack.c.l.b16 %v168
  %v453 = vunpack.c.l.b16 %v169
  %v454 = vunpack.c.h.b16 %v169
  %v455 = vunpack.c.l.b16 %v170
  %v456 = vunpack.c.h.b16 %v170
  %v457 = vunpack.c.l.b16 %v171
  %v458 = vunpack.c.h.b16 %v171
  %v459 = vunpack.c.l.b16 %v172
  %v460 = vunpack.c.l.b16 %v173
  %v461 = vunpack.c.h.b16 %v173
  %v462 = vunpack.c.l.b16 %v174
  %v463 = vunpack.c.h.b16 %v174
  %v464 = vunpack.c.l.b16 %v175
  %v465 = vunpack.c.h.b16 %v175
  %v466 = vunpack.c.l.b16 %v176
  %v467 = vunpack.c.l.b16 %v177
  %v468 = vunpack.c.h.b16 %v177
  %v469 = vunpack.c.l.b16 %v178
  %v470 = vunpack.c.h.b16 %v178
  %v471 = vunpack.c.l.b16 %v179
  %v472 = vunpack.c.h.b16 %v179
  %v473 = vunpack.c.l.b16 %v180
  %v474 = vunpack.c.l.b16 %v181
  %v475 = vunpack.c.h.b16 %v181
  %v476 = vunpack.c.l.b16 %v182
  %v477 = vunpack.c.h.b16 %v182
  %v478 = vunpack.c.l.b16 %v183
  %v479 = vunpack.c.h.b16 %v183
  %v480 = vunpack.c.l.b16 %v184
  %v481 = vunpack.c.l.b16 %v185
  %v482 = vunpack.c.h.b16 %v185
  %v483 = vunpack.c.l.b16 %v186
  %v484 = vunpack.c.h.b16 %v186
  %v485 = vunpack.c.l.b16 %v187
  %v486 = vunpack.c.h.b16 %v187
  %v487 = vunpack.c.l.b16 %v188
  %v488 = vunpack.c.l.b16 %v189
  %v489 = vunpack.c.h.b16 %v189
  %v490 = vunpack.c.l.b16 %v190
  %v491 = vunpack.c.h.b16 %v190
  %v492 = vunpack.c.l.b16 %v191
  %v493 = vunpack.c.h.b16 %v191
  %v494 = vunpack.c.l.b16 %v192
  %v495 = vunpack.c.l.b16 %v193
  %v496 = vunpack.c.h.b16 %v193
  %v497 = vunpack.c.l.b16 %v194
  %v498 = vunpack.c.h.b16 %v194
  %v499 = vunpack.c.l.b16 %v195
  %v500 = vunpack.c.h.b16 %v195
  %v501 = vunpack.c.l.b16 %v196
  %v502 = vunpack.c.l.b16 %v197
  %v503 = vunpack.c.h.b16 %v197
  %v504 = vunpack.c.l.b16 %v198
  %v505 = vunpack.c.h.b16 %v198
  %v506 = vunpack.c.l.b16 %v199
  %v507 = vunpack.c.h.b16 %v199
  %v508 = vunpack.c.l.b16 %v200
  %v509 = vunpack.c.l.b16 %v201
  %v510 = vunpack.c.h.b16 %v201
  %v511 = vunpack.c.l.b16 %v202
  %v512 = vunpack.c.h.b16 %v202
  %v513 = vunpack.c.l.b16 %v203
  %v514 = vunpack.c.h.b16 %v203
  %v515 = vunpack.c.l.b16 %v204
  %v516 = vunpack.c.l.b16 %v205
  %v517 = vunpack.c.h.b16 %v205
  %v518 = vunpack.c.l.b16 %v206
  %v519 = vunpack.c.h.b16 %v206
  %v520 = vunpack.c.l.b16 %v207
  %v521 = vunpack.c.h.b16 %v207
  %v522 = vunpack.c.l.b16 %v208
  %v523 = vunpack.c.l.b16 %v209
  %v524 = vunpack.c.h.b16 %v209
  %v525 = vunpack.c.l.b16 %v210
  %v526 = vunpack.c.h.b16 %v210
  %v527 = vunpack.c.l.b16 %v211
  %v528 = vunpack.c.h.b16 %v211
  %v529 = vunpack.c.l.b16 %v212
  %v530 = vunpack.c.l.b16 %v213
  %v531 = vunpack.c.h.b16 %v213
  %v532 = vunpack.c.l.b16 %v214
  %v533 = vunpack.c.h.b16 %v214
  %v534 = vunpack.c.l.b16 %v215
  %v535 = vunpack.c.h.b16 %v215
  %v536 = vunpack.c.l.b16 %v216
  %v537 = vunpack.c.l.b16 %v217
  %v538 = vunpack.c.h.b16 %v217
  %v539 = vunpack.c.l.b16 %v218
  %v540 = vunpack.c.h.b16 %v218
  %v541 = vunpack.c.l.b16 %v219
  %v542 = vunpack.c.h.b16 %v219
  %v543 = vunpack.c.l.b16 %v220
  %v544 = vunpack.c.l.b16 %v221
  %v545 = vunpack.c.h.b16 %v221
  %v546 = vunpack.c.l.b16 %v222
  %v547 = vunpack.c.h.b16 %v222
  %v548 = vunpack.c.l.b16 %v223
  %v549 = vunpack.c.h.b16 %v223
  %v550 = vunpack.c.l.b16 %v224
  %v551 = vunpack.c.l.b16 %v225
  %v552 = vunpack.c.h.b16 %v225
  %v553 = vunpack.c.l.b16 %v226
  %v554 = vunpack.c.h.b16 %v226
  %v555 = vunpack.c.l.b16 %v227
  %v556 = vunpack.c.h.b16 %v227
  %v557 = vunpack.c.l.b16 %v228
  %v558 = vunpack.c.l.b16 %v229
  %v559 = vunpack.c.h.b16 %v229
  %v560 = vunpack.c.l.b16 %v230
  %v561 = vunpack.c.h.b16 %v230
  %v562 = vunpack.c.l.b16 %v231
  %v563 = vunpack.c.h.b16 %v231
  %v564 = vunpack.c.l.b16 %v232
  %v565 = vunpack.c.l.b16 %v233
  %v566 = vunpack.c.h.b16 %v233
  %v567 = vunpack.c.l.b16 %v234
  %v568 = vunpack.c.h.b16 %v234
  %v569 = vunpack.c.l.b16 %v235
  %v570 = vunpack.c.h.b16 %v235
  %v571 = vunpack.c.l.b16 %v236
  %v572 = vunpack.c.l.b16 %v237
  %v573 = vunpack.c.h.b16 %v237
  %v574 = vunpack.c.l.b16 %v238
  %v575 = vunpack.c.h.b16 %v238
  %v576 = vunpack.c.l.b16 %v239
  %v577 = vunpack.c.h.b16 %v239
  %v578 = vunpack.c.l.b16 %v240
  %v579 = vunpack.c.l.b16 %v241
  %v580 = vunpack.c.h.b16 %v241
  %v581 = vunpack.c.l.b16 %v242
  %v582 = vunpack.c.h.b16 %v242
  %v583 = vunpack.c.l.b16 %v243
  %v584 = vunpack.c.h.b16 %v243
  %v585 = vunpack.c.l.b16 %v244
  %v586 = vunpack.c.l.b16 %v245
  %v587 = vunpack.c.h.b16 %v245
  %v588 = vunpack.c.l.b16 %v246
  %v589 = vunpack.c.h.b16 %v246
  %v590 = vunpack.c.l.b16 %v247
  %v591 = vunpack.c.h.b16 %v247
  %v592 = vunpack.c.l.b16 %v248
  %v593 = vunpack.c.l.b16 %v249
  %v594 = vunpack.c.h.b16 %v249
  %v595 = vunpack.c.l.b16 %v250
  %v596 = vunpack.c.h.b16 %v250
  %v597 = vunpack.c.l.b16 %v251
  %v598 = vunpack.c.h.b16 %v251
  %v599 = vunpack.c.l.b16 %v252
  %v600 = vunpack.c.l.b16 %v253
  %v601 = vunpack.c.h.b16 %v253
  %v602 = vunpack.c.l.b16 %v254
  %v603 = vunpack.c.h.b16 %v254
  %v604 = vunpack.c.l.b16 %v255
  %v605 = vunpack.c.h.b16 %v255
  %v606 = vunpack.c.l.b16 %v256
  %v607 = vunpack.c.l.b16 %v257
  %v608 = vunpack.c.h.b16 %v257
  %v609 = vunpack.c.l.b16 %v258
  %v610 = vunpack.c.h.b16 %v258
  %v611 = vunpack.c.l.b16 %v259
  %v612 = vunpack.c.h.b16 %v259
  %v613 = vunpack.c.l.b16 %v260
  %v614 = vunpack.c.l.b16 %v261
  %v615 = vunpack.c.h.b16 %v261
  %v616 = vunpack.c.l.b16 %v262
  %v617 = vunpack.c.h.b16 %v262
  %v618 = vunpack.c.l.b16 %v263
  %v619 = vunpack.c.h.b16 %v263
  %v620 = vunpack.c.l.b16 %v264
  %v621 = vunpack.c.l.b16 %v265
  %v622 = vunpack.c.h.b16 %v265
  %v623 = vunpack.c.l.b16 %v266
  %v624 = vunpack.c.h.b16 %v266
  %v625 = vunpack.c.l.b16 %v267
  %v626 = vunpack.c.h.b16 %v267
  %v627 = vunpack.c.l.b16 %v268
  %v628 = vunpack.c.l.b16 %v269
  %v629 = vunpack.c.h.b16 %v269
  %v630 = vunpack.c.l.b16 %v270
  %v631 = vunpack.c.h.b16 %v270
  %v632 = vunpack.c.l.b16 %v271
  %v633 = vunpack.c.h.b16 %v271
  %v634 = vunpack.c.l.b16 %v272
  %v635 = vunpack.c.l.b16 %v273
  %v636 = vunpack.c.h.b16 %v273
  %v637 = vunpack.c.l.b16 %v274
  %v638 = vunpack.c.h.b16 %v274
  %v639 = vunpack.c.l.b16 %v275
  %v640 = vunpack.c.h.b16 %v275
  %v641 = vunpack.c.l.b16 %v276
  %v642 = vunpack.c.l.b16 %v277
  %v643 = vunpack.c.h.b16 %v277
  %v644 = vunpack.c.l.b16 %v278
  %v645 = vunpack.c.h.b16 %v278
  %v646 = vunpack.c.l.b16 %v279
  %v647 = vunpack.c.h.b16 %v279
  %v648 = vunpack.c.l.b16 %v280
  %v649 = vpack.c.b16 %v432, %v425
  %v650 = vpack.c.b16 %v433, %v426
  %v651 = vpack.c.b16 %v434, %v427
  %v652 = vpack.c.b16 %v435, %v428
  %v653 = vpack.c.b16 %v436, %v429
  %v654 = vpack.c.b16 %v437, %v430
  %v655 = vpack.c.b16 %v438, %v431
  %v656 = vpack.c.b16 %v446, %v439
  %v657 = vpack.c.b16 %v447, %v440
  %v658 = vpack.c.b16 %v448, %v441
  %v659 = vpack.c.b16 %v449, %v442
  %v660 = vpack.c.b16 %v450, %v443
  %v661 = vpack.c.b16 %v451, %v444
  %v662 = vpack.c.b16 %v452, %v445
  %v663 = vpack.c.b16 %v460, %v453
  %v664 = vpack.c.b16 %v461, %v454
  %v665 = vpack.c.b16 %v462, %v455
  %v666 = vpack.c.b16 %v463, %v456
  %v667 = vpack.c.b16 %v464, %v457
  %v668 = vpack.c.b16 %v465, %v458
  %v669 = vpack.c.b16 %v466, %v459
  %v670 = vpack.c.b16 %v474, %v467
  %v671 = vpack.c.b16 %v475, %v468
  %v672 = vpack.c.b16 %v476, %v469
  %v673 = vpack.c.b16 %v477, %v470
  %v674 = vpack.c.b16 %v478, %v471
  %v675 = vpack.c.b16 %v479, %v472
  %v676 = vpack.c.b16 %v480, %v473
  %v677 = vpack.c.b16 %v488, %v481
  %v678 = vpack.c.b16 %v489, %v482
  %v679 = vpack.c.b16 %v490, %v483
  %v680 = vpack.c.b16 %v491, %v484
  %v681 = vpack.c.b16 %v492, %v485
  %v682 = vpack.c.b16 %v493, %v486
  %v683 = vpack.c.b16 %v494, %v487
  %v684 = vpack.c.b16 %v502, %v495
  %v685 = vpack.c.b16 %v503, %v496
  %v686 = vpack.c.b16 %v504, %v497
  %v687 = vpack.c.b16 %v505, %v498
  %v688 = vpack.c.b16 %v506, %v499
  %v689 = vpack.c.b16 %v507, %v500
  %v690 = vpack.c.b16 %v508, %v501
  %v691 = vpack.c.b16 %v516, %v509
  %v692 = vpack.c.b16 %v517, %v510
  %v693 = vpack.c.b16 %v518, %v511
  %v694 = vpack.c.b16 %v519, %v512
  %v695 = vpack.c.b16 %v520, %v513
  %v696 = vpack.c.b16 %v521, %v514
  %v697 = vpack.c.b16 %v522, %v515
  %v698 = vpack.c.b16 %v530, %v523
  %v699 = vpack.c.b16 %v531, %v524
  %v700 = vpack.c.b16 %v532, %v525
  %v701 = vpack.c.b16 %v533, %v526
  %v702 = vpack.c.b16 %v534, %v527
  %v703 = vpack.c.b16 %v535, %v528
  %v704 = vpack.c.b16 %v536, %v529
  %v705 = vpack.c.b16 %v544, %v537
  %v706 = vpack.c.b16 %v545, %v538
  %v707 = vpack.c.b16 %v546, %v539
  %v708 = vpack.c.b16 %v547, %v540
  %v709 = vpack.c.b16 %v548, %v541
  %v710 = vpack.c.b16 %v549, %v542
  %v711 = vpack.c.b16 %v550, %v543
  %v712 = vpack.c.b16 %v558, %v551
  %v713 = vpack.c.b16 %v559, %v552
  %v714 = vpack.c.b16 %v560, %v553
  %v715 = vpack.c.b16 %v561, %v554
  %v716 = vpack.c.b16 %v562, %v555
  %v717 = vpack.c.b16 %v563, %v556
  %v718 = vpack.c.b16 %v564, %v557
  %v719 = vpack.c.b16 %v572, %v565
  %v720 = vpack.c.b16 %v573, %v566
  %v721 = vpack.c.b16 %v574, %v567
  %v722 = vpack.c.b16 %v575, %v568
  %v723 = vpack.c.b16 %v576, %v569
  %v724 = vpack.c.b16 %v577, %v570
  %v725 = vpack.c.b16 %v578, %v571
  %v726 = vpack.c.b16 %v586, %v579
  %v727 = vpack.c.b16 %v587, %v580
  %v728 = vpack.c.b16 %v588, %v581
  %v729 = vpack.c.b16 %v589, %v582
  %v730 = vpack.c.b16 %v590, %v583
  %v731 = vpack.c.b16 %v591, %v584
  %v732 = vpack.c.b16 %v592, %v585
  %v733 = vpack.c.b16 %v600, %v593
  %v734 = vpack.c.b16 %v601, %v594
  %v735 = vpack.c.b16 %v602, %v595
  %v736 = vpack.c.b16 %v603, %v596
  %v737 = vpack.c.b16 %v604, %v597
  %v738 = vpack.c.b16 %v605, %v598
  %v739 = vpack.c.b16 %v606, %v599
  %v740 = vpack.c.b16 %v614, %v607
  %v741 = vpack.c.b16 %v615, %v608
  %v742 = vpack.c.b16 %v616, %v609
  %v743 = vpack.c.b16 %v617, %v610
  %v744 = vpack.c.b16 %v618, %v611
  %v745 = vpack.c.b16 %v619, %v612
  %v746 = vpack.c.b16 %v620, %v613
  %v747 = vpack.c.b16 %v628, %v621
  %v748 = vpack.c.b16 %v629, %v622
  %v749 = vpack.c.b16 %v630, %v623
  %v750 = vpack.c.b16 %v631, %v624
  %v751 = vpack.c.b16 %v632, %v625
  %v752 = vpack.c.b16 %v633, %v626
  %v753 = vpack.c.b16 %v634, %v627
  %v754 = vpack.c.b16 %v642, %v635
  %v755 = vpack.c.b16 %v643, %v636
  %v756 = vpack.c.b16 %v644, %v637
  %v757 = vpack.c.b16 %v645, %v638
  %v758 = vpack.c.b16 %v646, %v639
  %v759 = vpack.c.b16 %v647, %v640
  %v760 = vpack.c.b16 %v648, %v641
  %873 = vmatpush.bf16.msra.mxu0 %v698
  %874 = vmatpush.bf16.msra.mxu0 %v691
  %875 = vmatpush.bf16.msra.mxu0 %v684
  %876 = vmatpush.bf16.msra.mxu0 %v677
  %877 = vmatpush.bf16.msra.mxu0 %v670
  %878 = vmatpush.bf16.msra.mxu0 %v663
  %879 = vmatpush.bf16.msra.mxu0 %v656
  %880 = vmatpush.bf16.msra.mxu0 %v649
  %881 = vmatmul.bf16.gmra.mxu0 %v151
  %v882 = vpop.f32.mrf.mxu0
  %v883 = vadd.f32 %v283, %v882
  %v884 = vpop.f32.mrf.mxu0
  %885 = vdwg.mxu0
  %886 = vmatpush.bf16.msra.mxu0 %v754
  %887 = vmatpush.bf16.msra.mxu0 %v747
  %888 = vmatpush.bf16.msra.mxu0 %v740
  %889 = vmatpush.bf16.msra.mxu0 %v733
  %890 = vmatpush.bf16.msra.mxu0 %v726
  %891 = vmatpush.bf16.msra.mxu0 %v719
  %892 = vmatpush.bf16.msra.mxu0 %v712
  %893 = vmatpush.bf16.msra.mxu0 %v705
  %894 = vmatmul.bf16.gmra.mxu0 %v152
  %v895 = vpop.f32.mrf.mxu0
  %v896 = vadd.f32 %v883, %v895
  %v897 = vpop.f32.mrf.mxu0
  %898 = vdwg.mxu0
  %899 = vmatpush.bf16.msra.mxu0 %v699
  %900 = vmatpush.bf16.msra.mxu0 %v692
  %901 = vmatpush.bf16.msra.mxu0 %v685
  %902 = vmatpush.bf16.msra.mxu0 %v678
  %903 = vmatpush.bf16.msra.mxu0 %v671
  %904 = vmatpush.bf16.msra.mxu0 %v664
  %905 = vmatpush.bf16.msra.mxu0 %v657
  %906 = vmatpush.bf16.msra.mxu0 %v650
  %907 = vmatmul.bf16.gmra.mxu0 %v151
  %v908 = vpop.f32.mrf.mxu0
  %v909 = vadd.f32 %v284, %v908
  %v910 = vpop.f32.mrf.mxu0
  %911 = vdwg.mxu0
  %912 = vmatpush.bf16.msra.mxu0 %v755
  %913 = vmatpush.bf16.msra.mxu0 %v748
  %914 = vmatpush.bf16.msra.mxu0 %v741
  %915 = vmatpush.bf16.msra.mxu0 %v734
  %916 = vmatpush.bf16.msra.mxu0 %v727
  %917 = vmatpush.bf16.msra.mxu0 %v720
  %918 = vmatpush.bf16.msra.mxu0 %v713
  %919 = vmatpush.bf16.msra.mxu0 %v706
  %920 = vmatmul.bf16.gmra.mxu0 %v152
  %v921 = vpop.f32.mrf.mxu0
  %v922 = vadd.f32 %v909, %v921
  %v923 = vpop.f32.mrf.mxu0
  %924 = vdwg.mxu0
  %925 = vmatpush.bf16.msra.mxu0 %v700
  %926 = vmatpush.bf16.msra.mxu0 %v693
  %927 = vmatpush.bf16.msra.mxu0 %v686
  %928 = vmatpush.bf16.msra.mxu0 %v679
  %929 = vmatpush.bf16.msra.mxu0 %v672
  %930 = vmatpush.bf16.msra.mxu0 %v665
  %931 = vmatpush.bf16.msra.mxu0 %v658
  %932 = vmatpush.bf16.msra.mxu0 %v651
  %933 = vmatmul.bf16.gmra.mxu0 %v151
  %v934 = vpop.f32.mrf.mxu0
  %v935 = vadd.f32 %v285, %v934
  %v936 = vpop.f32.mrf.mxu0
  %937 = vdwg.mxu0
  %938 = vmatpush.bf16.msra.mxu0 %v756
  %939 = vmatpush.bf16.msra.mxu0 %v749
  %940 = vmatpush.bf16.msra.mxu0 %v742
  %941 = vmatpush.bf16.msra.mxu0 %v735
  %942 = vmatpush.bf16.msra.mxu0 %v728
  %943 = vmatpush.bf16.msra.mxu0 %v721
  %944 = vmatpush.bf16.msra.mxu0 %v714
  %945 = vmatpush.bf16.msra.mxu0 %v707
  %946 = vmatmul.bf16.gmra.mxu0 %v152
  %v947 = vpop.f32.mrf.mxu0
  %v948 = vadd.f32 %v935, %v947
  %v949 = vpop.f32.mrf.mxu0
  %950 = vdwg.mxu0
  %951 = vmatpush.bf16.msra.mxu0 %v701
  %952 = vmatpush.bf16.msra.mxu0 %v694
  %953 = vmatpush.bf16.msra.mxu0 %v687
  %954 = vmatpush.bf16.msra.mxu0 %v680
  %955 = vmatpush.bf16.msra.mxu0 %v673
  %956 = vmatpush.bf16.msra.mxu0 %v666
  %957 = vmatpush.bf16.msra.mxu0 %v659
  %958 = vmatpush.bf16.msra.mxu0 %v652
  %959 = vmatmul.bf16.gmra.mxu0 %v151
  %v960 = vpop.f32.mrf.mxu0
  %v961 = vadd.f32 %v286, %v960
  %v962 = vpop.f32.mrf.mxu0
  %963 = vdwg.mxu0
  %964 = vmatpush.bf16.msra.mxu0 %v757
  %965 = vmatpush.bf16.msra.mxu0 %v750
  %966 = vmatpush.bf16.msra.mxu0 %v743
  %967 = vmatpush.bf16.msra.mxu0 %v736
  %968 = vmatpush.bf16.msra.mxu0 %v729
  %969 = vmatpush.bf16.msra.mxu0 %v722
  %970 = vmatpush.bf16.msra.mxu0 %v715
  %971 = vmatpush.bf16.msra.mxu0 %v708
  %972 = vmatmul.bf16.gmra.mxu0 %v152
  %v973 = vpop.f32.mrf.mxu0
  %v974 = vadd.f32 %v961, %v973
  %v975 = vpop.f32.mrf.mxu0
  %976 = vdwg.mxu0
  %977 = vmatpush.bf16.msra.mxu0 %v702
  %978 = vmatpush.bf16.msra.mxu0 %v695
  %979 = vmatpush.bf16.msra.mxu0 %v688
  %980 = vmatpush.bf16.msra.mxu0 %v681
  %981 = vmatpush.bf16.msra.mxu0 %v674
  %982 = vmatpush.bf16.msra.mxu0 %v667
  %983 = vmatpush.bf16.msra.mxu0 %v660
  %984 = vmatpush.bf16.msra.mxu0 %v653
  %985 = vmatmul.bf16.gmra.mxu0 %v151
  %v986 = vpop.f32.mrf.mxu0
  %v987 = vadd.f32 %v287, %v986
  %v988 = vpop.f32.mrf.mxu0
  %989 = vdwg.mxu0
  %990 = vmatpush.bf16.msra.mxu0 %v758
  %991 = vmatpush.bf16.msra.mxu0 %v751
  %992 = vmatpush.bf16.msra.mxu0 %v744
  %993 = vmatpush.bf16.msra.mxu0 %v737
  %994 = vmatpush.bf16.msra.mxu0 %v730
  %995 = vmatpush.bf16.msra.mxu0 %v723
  %996 = vmatpush.bf16.msra.mxu0 %v716
  %997 = vmatpush.bf16.msra.mxu0 %v709
  %998 = vmatmul.bf16.gmra.mxu0 %v152
  %v999 = vpop.f32.mrf.mxu0
  %v1000 = vadd.f32 %v987, %v999
  %v1001 = vpop.f32.mrf.mxu0
  %1002 = vdwg.mxu0
  %1003 = vmatpush.bf16.msra.mxu0 %v703
  %1004 = vmatpush.bf16.msra.mxu0 %v696
  %1005 = vmatpush.bf16.msra.mxu0 %v689
  %1006 = vmatpush.bf16.msra.mxu0 %v682
  %1007 = vmatpush.bf16.msra.mxu0 %v675
  %1008 = vmatpush.bf16.msra.mxu0 %v668
  %1009 = vmatpush.bf16.msra.mxu0 %v661
  %1010 = vmatpush.bf16.msra.mxu0 %v654
  %1011 = vmatmul.bf16.gmra.mxu0 %v151
  %v1012 = vpop.f32.mrf.mxu0
  %v1013 = vadd.f32 %v288, %v1012
  %v1014 = vpop.f32.mrf.mxu0
  %1015 = vdwg.mxu0
  %1016 = vmatpush.bf16.msra.mxu0 %v759
  %1017 = vmatpush.bf16.msra.mxu0 %v752
  %1018 = vmatpush.bf16.msra.mxu0 %v745
  %1019 = vmatpush.bf16.msra.mxu0 %v738
  %1020 = vmatpush.bf16.msra.mxu0 %v731
  %1021 = vmatpush.bf16.msra.mxu0 %v724
  %1022 = vmatpush.bf16.msra.mxu0 %v717
  %1023 = vmatpush.bf16.msra.mxu0 %v710
  %1024 = vmatmul.bf16.gmra.mxu0 %v152
  %v1025 = vpop.f32.mrf.mxu0
  %v1026 = vadd.f32 %v1013, %v1025
  %v1027 = vpop.f32.mrf.mxu0
  %1028 = vdwg.mxu0
  %1029 = vmatpush.bf16.msra.mxu0 %v704
  %1030 = vmatpush.bf16.msra.mxu0 %v697
  %1031 = vmatpush.bf16.msra.mxu0 %v690
  %1032 = vmatpush.bf16.msra.mxu0 %v683
  %1033 = vmatpush.bf16.msra.mxu0 %v676
  %1034 = vmatpush.bf16.msra.mxu0 %v669
  %1035 = vmatpush.bf16.msra.mxu0 %v662
  %1036 = vmatpush.bf16.msra.mxu0 %v655
  %1037 = vmatmul.bf16.gmra.mxu0 %v151
  %v1038 = vpop.f32.mrf.mxu0
  %v1039 = vadd.f32 %v289, %v1038
  %v1040 = vpop.f32.mrf.mxu0
  %1041 = vdwg.mxu0
  %1042 = vmatpush.bf16.msra.mxu0 %v760
  %1043 = vmatpush.bf16.msra.mxu0 %v753
  %1044 = vmatpush.bf16.msra.mxu0 %v746
  %1045 = vmatpush.bf16.msra.mxu0 %v739
  %1046 = vmatpush.bf16.msra.mxu0 %v732
  %1047 = vmatpush.bf16.msra.mxu0 %v725
  %1048 = vmatpush.bf16.msra.mxu0 %v718
  %1049 = vmatpush.bf16.msra.mxu0 %v711
  %1050 = vmatmul.bf16.gmra.mxu0 %v152
  %v1051 = vpop.f32.mrf.mxu0
  %v1052 = vadd.f32 %v1039, %v1051
  %v1053 = vpop.f32.mrf.mxu0
  %1054 = vdwg.mxu0
  %v1055 = vpack.c.bf16 %v896, %v896
  %v1056 = vpack.c.bf16 %v922, %v922
  %v1057 = vpack.c.bf16 %v948, %v948
  %v1058 = vpack.c.bf16 %v974, %v974
  %v1059 = vpack.c.bf16 %v1000, %v1000
  %v1060 = vpack.c.bf16 %v1026, %v1026
  %v1061 = vpack.c.bf16 %v1052, %v1052
  %v1062 = vunpack.c.l.bf16 %v1055
  %v1063 = vunpack.c.l.bf16 %v1056
  %v1064 = vunpack.c.l.bf16 %v1057
  %v1065 = vunpack.c.l.bf16 %v1058
  %v1066 = vunpack.c.l.bf16 %v1059
  %v1067 = vunpack.c.l.bf16 %v1060
  %v1068 = vunpack.c.l.bf16 %v1061
  %v1069 = vtanh.pop %v1062
  %v1070 = vtanh.pop %v1063
  %v1071 = vtanh.pop %v1064
  %v1072 = vtanh.pop %v1065
  %v1073 = vtanh.pop %v1066
  %v1074 = vtanh.pop %v1067
  %v1075 = vtanh.pop %v1068
  %v1076 = vpack.c.bf16 %v1069, %v1069
  %v1077 = vpack.c.bf16 %v1070, %v1070
  %v1078 = vpack.c.bf16 %v1071, %v1071
  %v1079 = vpack.c.bf16 %v1072, %v1072
  %v1080 = vpack.c.bf16 %v1073, %v1073
  %v1081 = vpack.c.bf16 %v1074, %v1074
  %v1082 = vpack.c.bf16 %v1075, %v1075
  %v1083 = vunpack.c.l.bf16 %v1076
  %v1084 = vunpack.c.l.bf16 %v1077
  %v1085 = vunpack.c.l.bf16 %v1078
  %v1086 = vunpack.c.l.bf16 %v1079
  %v1087 = vunpack.c.l.bf16 %v1080
  %v1088 = vunpack.c.l.bf16 %v1081
  %v1089 = vunpack.c.l.bf16 %v1082
  %1090 = vst [vmem:[%s5] sm:$0xff] %v1083
  %1091 = vst [vmem:[%s5 + $0x8] sm:$0xff] %v1084
  %1092 = vst [vmem:[%s5 + $0x10] sm:$0xff] %v1085
  %1093 = vst [vmem:[%s5 + $0x18] sm:$0xff] %v1086
  %1094 = vst [vmem:[%s5 + $0x20] sm:$0xff] %v1087
  %1095 = vst [vmem:[%s5 + $0x28] sm:$0xff] %v1088
  %vm1096 = vcmask 130048
  %1097 = vst.msk [vmem:[%s5 + $0x30] sm:$0xff] %vm1096, %v1089
  // Predicated region
  $region22: #{mygan_g_forward.1} parent=0 // pred_check
    _
  $region23: #{mygan_g_forward.1} parent=0 // pred_check_branch
    %1099 = sbr.rel (0) target = $region25
  $region24: #{mygan_g_forward.1} parent=0 // pred_region
    _
  $region25: #{mygan_g_forward.1} parent=0 // pred_fallthru
    _
  // Predicated region
  $region26: #{mygan_g_forward.1} parent=0 // pred_check
    _
  $region27: #{mygan_g_forward.1} parent=0 // pred_check_branch
    %1101 = sbr.rel (0) target = $region29
  $region28: #{mygan_g_forward.1} parent=0 // pred_region
    _
  $region29: #{mygan_g_forward.1} parent=0 // pred_fallthru
    _

</llo_original>
